<compile_context>
chip_gen: v7x
topology: tpu7x:2x2x1
jax: 0.10.0
libtpu: 0.0.40
codegen_flags: <defaults>
</compile_context>

<pallas_src>
import functools

import jax
import jax.numpy as jnp
from jax.experimental import pallas as pl
from jax.experimental.pallas import tpu as pltpu

C_HIDDEN = 32  # fixed by the module


def _vmem_capacity_bytes():
    try:
        return int(pltpu.get_tpu_info().vmem_capacity_bytes)
    except Exception:
        return 64 * 1024 * 1024  # conservative: v7x per-TensorCore VMEM


# ---------------------------------------------------------------------------
# Stage 1: RMSNorm(c_z) + fused [qx|kx|q|k|g] projection + gate + mask.
# ---------------------------------------------------------------------------
def _proj_kernel(z_ref, mask_ref, w_ref, b_ref, q_ref, k_ref, g_ref, *, eps, ch):
    _, t_rows, n_j, c_z = z_ref.shape
    rows = t_rows * n_j

    x = z_ref[0].reshape(rows, c_z).astype(jnp.float32)  # (rows, c_z)
    xt = x.T                                             # (c_z, rows)
    ms = jnp.mean(xt * xt, axis=0, keepdims=True)        # (1, rows)
    znt = xt * jax.lax.rsqrt(ms + eps)                   # norm_in weight folded into w_ref

    # one wide MXU matmul: (4*ch + c_z, c_z) @ (c_z, rows)
    proj = jnp.dot(w_ref[...], znt,
                   preferred_element_type=jnp.float32) + b_ref[...]

    m = mask_ref[0]                                      # (1, rows), lane-dense
    q = proj[0 * ch:1 * ch] * jax.nn.sigmoid(proj[2 * ch:3 * ch]) * m
    k = proj[1 * ch:2 * ch] * jax.nn.sigmoid(proj[3 * ch:4 * ch]) * m
    g = jax.nn.sigmoid(proj[4 * ch:])

    q_ref[0] = q.astype(q_ref.dtype)                     # (ch, rows) bf16
    k_ref[0] = k.astype(k_ref.dtype)
    g_ref[0] = g.astype(g_ref.dtype)                     # (c_z, rows) f32


# ---------------------------------------------------------------------------
# Stage 2: triangle contraction, j-reduction grid axis, f32 accumulation
# directly in the (output-resident) attn block.
# ---------------------------------------------------------------------------
def _contract_kernel_rows(l_ref, r_ref, o_ref):
    # transpose=False: attn[c, x, y] += sum_j L[c, x, j] * R[c, y, j]
    @pl.when(pl.program_id(3) == 0)
    def _():
        o_ref[...] = jnp.zeros_like(o_ref)
    o_ref[0] = o_ref[0] + jnp.einsum(
        'cxj,cyj->cxy', l_ref[0], r_ref[0], preferred_element_type=jnp.float32)


def _contract_kernel_cols(l_ref, r_ref, o_ref):
    # transpose=True: attn[c, a, b] += sum_j L[c, j, a] * R[c, j, b]
    # (one f32 minor-dim transpose per loaded L tile, then a natural batched
    #  bf16 MXU matmul; avoids any HBM relayout of z / the output)
    @pl.when(pl.program_id(3) == 0)
    def _():
        o_ref[...] = jnp.zeros_like(o_ref)
    lt = jnp.swapaxes(l_ref[0].astype(jnp.float32), 1, 2).astype(jnp.bfloat16)
    o_ref[0] = o_ref[0] + jnp.einsum(
        'cxj,cjy->cxy', lt, r_ref[0], preferred_element_type=jnp.float32)


# ---------------------------------------------------------------------------
# Stage 3: RMSNorm(c_hidden) (weight folded into w_z), linear_z, gate.
# Channel-leading math; a single transpose for the channel-last store.
# ---------------------------------------------------------------------------
def _out_kernel(attn_ref, g_ref, wzt_ref, bz_ref, o_ref, *, eps):
    a = attn_ref[0]                                      # (ch, rr) f32
    ms = jnp.mean(a * a, axis=0, keepdims=True)          # (1, rr)
    ahat = a * jax.lax.rsqrt(ms + eps)                   # (ch, rr)
    out_cl = jnp.dot(wzt_ref[...], ahat,
                     preferred_element_type=jnp.float32) + bz_ref[...]  # (c_z, rr)
    out_cl = out_cl * g_ref[0]                           # gate, channel-leading
    o_ref[0] = out_cl.T.astype(o_ref.dtype)              # (rr, c_z) channel-last store


# ---------------------------------------------------------------------------
# Tile pickers (generation-aware VMEM budgets, no full-array fallback traps).
# ---------------------------------------------------------------------------
def _legal_tiles(n):
    # tiles whose placement keeps every BlockSpec dim a multiple of 128 or full
    c = [t for t in (1024, 512, 384, 256, 128) if t <= n and n % t == 0]
    if n not in c:
        c.append(n)
    return sorted(set(c), reverse=True)


def _pick_row_tile(n_i, n_j, c_z, ch, budget):
    for t in (512, 256, 128, 64, 32, 16, 8, 4, 2, 1):
        if t > n_i or n_i % t:
            continue
        if (t * n_j) % 128 and t != n_i:
            continue
        # z(f32) + q/k(bf16) + g(f32) + mask, double-buffered
        ws = 2 * t * n_j * (4 * c_z + 2 * 2 * ch + 4 * c_z + 4)
        if ws <= budget:
            return t
    return n_i


def _pick_contract_tiles(n, ch, budget, *, transposed, want_parallel):
    cands = _legal_tiles(n)
    best = None
    for tx in cands:
        for ty in cands:
            for tj in cands:
                ws = (2 * 2 * ch * tj * (tx + ty)   # bf16 inputs, double-buffered
                      + 2 * 4 * ch * tx * ty)       # f32 out block, double-buffered
                if transposed:
                    ws += 8 * ch * tx * tj          # in-kernel f32 transpose temps
                if ws > budget:
                    continue
                nblk = (n // tx) * (n // ty)
                # prefer >=2 parallel blocks (v7x dual TensorCore), then fewest
                # HBM re-reads, then biggest tiles / deepest j block.
                score = (min(nblk, want_parallel),
                         -(n // tx + n // ty), tx * ty, tj)
                if best is None or score > best[0]:
                    best = (score, (tx, ty, tj))
    if best is None:
        t = cands[-1]   # smallest legal tile; never silently take the full array
        return (t, t, t)
    return best[1]


def _pick_out_chunk(total, ch, c_z, budget):
    for r in (8192, 4096, 2048, 1024, 512, 256, 128, 64, 32, 16, 8):
        if r > total or total % r:
            continue
        if r % 128 and r != total:
            continue
        if 2 * r * (4 * ch + 8 * c_z) <= budget:
            return r
    return total


# ---------------------------------------------------------------------------
# Wrapper
# ---------------------------------------------------------------------------
def triangle_update(z, z_mask, params, *, eps=1e-6, transpose=False,
                    row_tile=None, contract_tiles=None, out_chunk=None):
    B, n_i, n_j, c_z = z.shape
    # g[i, j] gates o[i, I'=j]; the module itself requires a square pair rep.
    assert n_i == n_j, "TriangleUpdate needs a square pair representation"
    ch = C_HIDDEN
    c_out = 4 * ch + c_z

    cap = _vmem_capacity_bytes()
    vmem_limit = min(int(cap * 0.75), 112 * 1024 * 1024)

    f32 = jnp.float32
    # ---- fold the RMSNorm weights into the adjacent Linear weights (exact) ----
    w_in = jnp.asarray(params['norm_in_w'], f32)
    w_all = jnp.concatenate(
        [params['w_qx'], params['w_kx'], params['w_q'], params['w_k'],
         params['w_g']], axis=1).astype(f32)                   # (c_z, 4ch+c_z)
    w_all = (w_in[:, None] * w_all).T                          # (4ch+c_z, c_z)
    b_all = jnp.concatenate(
        [params['b_qx'], params['b_kx'], params['b_q'], params['b_k'],
         params['b_g']]).astype(f32).reshape(-1, 1)            # (4ch+c_z, 1)
    w_zt = (jnp.asarray(params['norm_out_w'], f32)[:, None]
            * jnp.asarray(params['w_z'], f32)).T               # (c_z, ch)
    b_z = jnp.asarray(params['b_z'], f32).reshape(-1, 1)       # (c_z, 1)

    # transpose=True: only the (tiny) mask is relaid out; z stays in place.
    mask = jnp.swapaxes(z_mask, -1, -2) if transpose else z_mask
    mask = mask.astype(f32).reshape(B, 1, n_i * n_j)

    # ---- tile sizes ----
    t1 = row_tile if row_tile is not None else _pick_row_tile(
        n_i, n_j, c_z, ch, budget=min(24 << 20, vmem_limit // 4))
    want_par = 2 if B == 1 else 1
    if contract_tiles is not None:
        tx, ty, tj = contract_tiles
    else:
        tx, ty, tj = _pick_contract_tiles(
            n_i, ch, budget=int(vmem_limit * 0.8),
            transposed=transpose, want_parallel=want_par)
    total = n_i * n_i
    rr = out_chunk if out_chunk is not None else _pick_out_chunk(
        total, ch, c_z, budget=min(16 << 20, vmem_limit // 4))

    assert n_i % t1 == 0 and ((t1 * n_j) % 128 == 0 or t1 == n_i)
    for t in (tx, ty, tj):
        assert n_i % t == 0 and (t % 128 == 0 or t == n_i)
    assert total % rr == 0 and (rr % 128 == 0 or rr == total)

    def cp(sem):
        return pltpu.CompilerParams(dimension_semantics=sem,
                                    vmem_limit_bytes=vmem_limit)

    # ---------------- stage 1: fused projection ----------------
    q_flat, k_flat, g_flat = pl.pallas_call(
        functools.partial(_proj_kernel, eps=eps, ch=ch),
        out_shape=(
            jax.ShapeDtypeStruct((B, ch, n_i * n_j), jnp.bfloat16),
            jax.ShapeDtypeStruct((B, ch, n_i * n_j), jnp.bfloat16),
            jax.ShapeDtypeStruct((B, c_z, n_i * n_j), jnp.float32),
        ),
        grid_spec=pltpu.PrefetchScalarGridSpec(
            num_scalar_prefetch=0,
            grid=(B, n_i // t1),
            in_specs=[
                pl.BlockSpec((1, t1, n_j, c_z), lambda b, r: (b, r, 0, 0)),
                pl.BlockSpec((1, 1, t1 * n_j), lambda b, r: (b, 0, r)),
                pl.BlockSpec((c_out, c_z), lambda b, r: (0, 0)),
                pl.BlockSpec((c_out, 1), lambda b, r: (0, 0)),
            ],
            out_specs=[
                pl.BlockSpec((1, ch, t1 * n_j), lambda b, r: (b, 0, r)),
                pl.BlockSpec((1, ch, t1 * n_j), lambda b, r: (b, 0, r)),
                pl.BlockSpec((1, c_z, t1 * n_j), lambda b, r: (b, 0, r)),
            ]),
        compiler_params=cp(("parallel", "parallel")),
        cost_estimate=pl.CostEstimate(
            flops=2 * B * n_i * n_j * c_z * c_out,
            transcendentals=B * n_i * n_j * (2 * ch + c_z),
            bytes_accessed=B * n_i * n_j * (8 * c_z + 4 * ch + 4)),
    )(z, mask, w_all, b_all)

    # ---------------- stage 2: triangle contraction on the MXU ----------------
    q4 = q_flat.reshape(B, ch, n_i, n_j)     # free row-major reshapes
    k4 = k_flat.reshape(B, ch, n_i, n_j)
    gx, gy, gj = n_i // tx, n_i // ty, n_j // tj

    if not transpose:
        kernel2, l_arr, r_arr = _contract_kernel_rows, q4, k4
        l_spec = pl.BlockSpec((1, ch, tx, tj), lambda b, x, y, j: (b, 0, x, j))
        r_spec = pl.BlockSpec((1, ch, ty, tj), lambda b, x, y, j: (b, 0, y, j))
    else:
        kernel2, l_arr, r_arr = _contract_kernel_cols, k4, q4
        l_spec = pl.BlockSpec((1, ch, tj, tx), lambda b, x, y, j: (b, 0, j, x))
        r_spec = pl.BlockSpec((1, ch, tj, ty), lambda b, x, y, j: (b, 0, j, y))

    attn = pl.pallas_call(
        kernel2,
        out_shape=jax.ShapeDtypeStruct((B, ch, n_i, n_i), jnp.float32),
        grid_spec=pltpu.PrefetchScalarGridSpec(
            num_scalar_prefetch=0,
            grid=(B, gx, gy, gj),
            in_specs=[l_spec, r_spec],
            out_specs=pl.BlockSpec((1, ch, tx, ty),
                                   lambda b, x, y, j: (b, 0, x, y))),
        compiler_params=cp(("parallel", "parallel", "parallel", "arbitrary")),
        cost_estimate=pl.CostEstimate(
            flops=2 * B * ch * n_i * n_i * n_j,
            transcendentals=0,
            bytes_accessed=B * ch * (2 * n_i * n_j * (gx + gy) + 4 * n_i * n_i)),
    )(l_arr, r_arr)

    # ---------------- stage 3: norm_out + linear_z + gate ----------------
    attn_flat = attn.reshape(B, ch, total)

    out_flat = pl.pallas_call(
        functools.partial(_out_kernel, eps=eps),
        out_shape=jax.ShapeDtypeStruct((B, total, c_z), jnp.float32),
        grid_spec=pltpu.PrefetchScalarGridSpec(
            num_scalar_prefetch=0,
            grid=(B, total // rr),
            in_specs=[
                pl.BlockSpec((1, ch, rr), lambda b, c: (b, 0, c)),
                pl.BlockSpec((1, c_z, rr), lambda b, c: (b, 0, c)),
                pl.BlockSpec((c_z, ch), lambda b, c: (0, 0)),
                pl.BlockSpec((c_z, 1), lambda b, c: (0, 0)),
            ],
            out_specs=pl.BlockSpec((1, rr, c_z), lambda b, c: (b, c, 0))),
        compiler_params=cp(("parallel", "parallel")),
        cost_estimate=pl.CostEstimate(
            flops=2 * B * total * ch * c_z,
            transcendentals=0,
            bytes_accessed=B * total * (4 * ch + 8 * c_z)),
    )(attn_flat, g_flat, w_zt, b_z)

    # output is produced directly in the module's (i, j) order for both
    # transpose modes -> no trailing swapaxes relayout.
    return out_flat.reshape(B, n_i, n_i, c_z).astype(jnp.float32)


# ---------------------------------------------------------------------------
# Pure-JAX reference (mirrors the PyTorch forward; HIGHEST-precision matmuls
# so it is a true f32 ground truth).
# ---------------------------------------------------------------------------
def triangle_update_ref(z, z_mask, params, *, eps=1e-6, transpose=False):
    hp = jax.lax.Precision.HIGHEST
    z = z.astype(jnp.float32)
    if transpose:
        z = jnp.swapaxes(z, -2, -3)

    def rms(x, w):
        return x * jax.lax.rsqrt(jnp.mean(x * x, axis=-1, keepdims=True) + eps) * w

    def lin(x, w, b):
        return jnp.einsum('...c,cd->...d', x, w, precision=hp) + b

    zn = rms(z, params['norm_in_w'])
    m = z_mask[..., None]
    q = lin(zn, params['w_qx'], params['b_qx']) \
        * jax.nn.sigmoid(lin(zn, params['w_q'], params['b_q'])) * m
    k = lin(zn, params['w_kx'], params['b_kx']) \
        * jax.nn.sigmoid(lin(zn, params['w_k'], params['b_k'])) * m
    g = jax.nn.sigmoid(lin(zn, params['w_g'], params['b_g']))
    attn = jnp.einsum('bijc,bkjc->bikc', q, k, precision=hp)
    attn = rms(attn, params['norm_out_w'])
    o = lin(attn, params['w_z'], params['b_z']) * g
    if transpose:
        o = jnp.swapaxes(o, -2, -3)
    return o.astype(jnp.float32)


# ---------------------------------------------------------------------------
# Deterministic synthetic parameters (shapes follow the module __init__).
# 'gating'/'final' inits would zero the weights -- random values keep the
# numerics non-trivial.
# ---------------------------------------------------------------------------
def init_params(key, c_z, c_hidden=C_HIDDEN):
    keys = jax.random.split(key, 16)

    def w(k, fi, fo, scale=0.3):
        return scale * jax.random.normal(k, (fi, fo), jnp.float32)

    def b(k, n, scale=0.1):
        return scale * jax.random.normal(k, (n,), jnp.float32)

    return dict(
        norm_in_w=1.0 + 0.1 * jax.random.normal(keys[0], (c_z,), jnp.float32),
        w_qx=w(keys[1], c_z, c_hidden), b_qx=b(keys[2], c_hidden),
        w_q=w(keys[3], c_z, c_hidden),  b_q=b(keys[4], c_hidden),
        w_kx=w(keys[5], c_z, c_hidden), b_kx=b(keys[6], c_hidden),
        w_k=w(keys[7], c_z, c_hidden),  b_k=b(keys[8], c_hidden),
        w_g=w(keys[9], c_z, c_z),       b_g=b(keys[10], c_z),
        norm_out_w=1.0 + 0.1 * jax.random.normal(keys[11], (c_hidden,), jnp.float32),
        w_z=w(keys[12], c_hidden, c_z), b_z=b(keys[13], c_z),
    )


if __name__ == "__main__":
    key = jax.random.PRNGKey(0)
    eps = 1e-6
    ok = True

    # (B, N, c_z, tile overrides).  The first (small) config forces multi-tile
    # grids in stages 1/3; the second exercises the auto tiling incl. the
    # j-reduction axis and the >=2-parallel-blocks heuristic.
    configs = [
        (2, 16, 64, dict(row_tile=8, out_chunk=128)),
        (1, 256, 64, dict()),
    ]

    for cfg_idx, (B, N, c_z, tiles) in enumerate(configs):
        k_z, k_m, k_p = jax.random.split(jax.random.fold_in(key, cfg_idx), 3)
        z = jax.random.normal(k_z, (B, N, N, c_z), jnp.float32)
        z_mask = (jax.random.uniform(k_m, (B, N, N)) > 0.2).astype(jnp.float32)
        params = init_params(k_p, c_z)

        for transpose in (False, True):
            out = jax.block_until_ready(
                triangle_update(z, z_mask, params, eps=eps,
                                transpose=transpose, **tiles))
            ref = jax.block_until_ready(
                triangle_update_ref(z, z_mask, params, eps=eps,
                                    transpose=transpose))
            diff = out - ref
            err = float(jnp.max(jnp.abs(diff)))
            rel = float(jnp.sqrt(jnp.sum(diff * diff) /
                                 (jnp.sum(ref * ref) + 1e-30)))
            # q/k deliberately ride in bf16 into the MXU (halves the dominant
            # HBM stream), so the absolute error scales with |out| (~O(5)
            # here; ~2.6e-2 max observed at N=256).  6e-2 abs / 1e-2 relative
            # Frobenius gives ~2x headroom while still catching any real
            # indexing / mask / weight-fold bug (those give rel >= 0.1).
            good = (out.shape == ref.shape and jnp.isfinite(jnp.asarray(err))
                    and err <= 6e-2 and rel <= 1e-2)
            if not bool(good):
                ok = False
                print("mismatch (B=%d N=%d c_z=%d transpose=%s): "
                      "max abs %.3e rel %.3e" % (B, N, c_z, transpose, err, rel))

    if ok:
        print("KERNEL_OK")
</pallas_src>

<mosaic_0001>
module attributes {stable_mosaic.version = 11 : i64} {
  func.func @_proj_kernel(%arg0: i32, %arg1: i32, %arg2: memref<1x8x16x64xf32, #tpu.memory_space<vmem>>, %arg3: memref<1x1x128xf32, #tpu.memory_space<vmem>>, %arg4: memref<192x64xf32, #tpu.memory_space<vmem>>, %arg5: memref<192x1xf32, #tpu.memory_space<vmem>>, %arg6: memref<1x32x128xbf16, #tpu.memory_space<vmem>>, %arg7: memref<1x32x128xbf16, #tpu.memory_space<vmem>>, %arg8: memref<1x64x128xf32, #tpu.memory_space<vmem>>) attributes {dimension_semantics = [#tpu.dimension_semantics<parallel>, #tpu.dimension_semantics<parallel>], iteration_bounds = array<i64: 2, 2>, scalar_prefetch = 0 : i64, scratch_operands = 0 : i64, tpu.core_type = #tpu.core_type<tc>, window_params = [{transform_indices = @transform_0, window_bounds = array<i64: 1, 8, 16, 64>}, {transform_indices = @transform_1, window_bounds = array<i64: 1, 1, 128>}, {pipeline_mode = #tpu.pipeline_mode<synchronous>, transform_indices = @transform_2, window_bounds = array<i64: 192, 64>}, {pipeline_mode = #tpu.pipeline_mode<synchronous>, transform_indices = @transform_3, window_bounds = array<i64: 192, 1>}, {transform_indices = @transform_4, window_bounds = array<i64: 1, 32, 128>}, {transform_indices = @transform_5, window_bounds = array<i64: 1, 32, 128>}, {transform_indices = @transform_6, window_bounds = array<i64: 1, 64, 128>}]} {
    %c0 = arith.constant 0 : index
    %c0_0 = arith.constant 0 : index
    %c0_1 = arith.constant 0 : index
    %c0_2 = arith.constant 0 : index
    %0 = vector.load %arg2[%c0, %c0_0, %c0_1, %c0_2] : memref<1x8x16x64xf32, #tpu.memory_space<vmem>>, vector<1x8x16x64xf32>
    %1 = vector.shape_cast %0 : vector<1x8x16x64xf32> to vector<8x16x64xf32>
    %2 = vector.shape_cast %1 : vector<8x16x64xf32> to vector<128x64xf32>
    %3 = tpu.transpose %2, [1, 0] : vector<128x64xf32> -> vector<64x128xf32>
    %4 = arith.mulf %3, %3 : vector<64x128xf32>
    %cst = arith.constant dense<0.000000e+00> : vector<128xf32>
    %5 = vector.multi_reduction <add>, %4, %cst [0] : vector<64x128xf32> to vector<128xf32>
    %6 = vector.shape_cast %5 : vector<128xf32> to vector<1x128xf32>
    %cst_3 = arith.constant 6.400000e+01 : f32
    %7 = vector.broadcast %cst_3 : f32 to vector<1x128xf32>
    %8 = arith.divf %6, %7 : vector<1x128xf32>
    %cst_4 = arith.constant 9.99999997E-7 : f32
    %9 = vector.broadcast %cst_4 : f32 to vector<1x128xf32>
    %10 = arith.addf %8, %9 : vector<1x128xf32>
    %11 = math.rsqrt %10 : vector<1x128xf32>
    %12 = vector.broadcast %11 : vector<1x128xf32> to vector<64x128xf32>
    %13 = arith.mulf %3, %12 : vector<64x128xf32>
    %c0_5 = arith.constant 0 : index
    %c0_6 = arith.constant 0 : index
    %14 = vector.load %arg4[%c0_5, %c0_6] : memref<192x64xf32, #tpu.memory_space<vmem>>, vector<192x64xf32>
    %cst_7 = arith.constant dense<0.000000e+00> : vector<192x128xf32>
    %15 = tpu.matmul %14, %13, %cst_7 {dimension_numbers = #tpu.dot_dimension_numbers<[1], [0], [0], [1], [0, 0, 1, 1], [], []>} : vector<192x64xf32>, vector<64x128xf32>, vector<192x128xf32> -> vector<192x128xf32>
    %c0_8 = arith.constant 0 : index
    %c0_9 = arith.constant 0 : index
    %16 = vector.load %arg5[%c0_8, %c0_9] : memref<192x1xf32, #tpu.memory_space<vmem>>, vector<192x1xf32>
    %17 = vector.broadcast %16 : vector<192x1xf32> to vector<192x128xf32>
    %18 = arith.addf %15, %17 : vector<192x128xf32>
    %c0_10 = arith.constant 0 : index
    %c0_11 = arith.constant 0 : index
    %c0_12 = arith.constant 0 : index
    %19 = vector.load %arg3[%c0_10, %c0_11, %c0_12] : memref<1x1x128xf32, #tpu.memory_space<vmem>>, vector<1x1x128xf32>
    %20 = vector.shape_cast %19 : vector<1x1x128xf32> to vector<1x128xf32>
    %21 = vector.extract_strided_slice %18 {offsets = [0, 0], sizes = [32, 128], strides = [1, 1]} : vector<192x128xf32> to vector<32x128xf32>
    %22 = vector.extract_strided_slice %18 {offsets = [64, 0], sizes = [32, 128], strides = [1, 1]} : vector<192x128xf32> to vector<32x128xf32>
    %23 = arith.negf %22 : vector<32x128xf32>
    %24 = math.exp %23 : vector<32x128xf32>
    %cst_13 = arith.constant 1.000000e+00 : f32
    %25 = vector.broadcast %cst_13 : f32 to vector<32x128xf32>
    %26 = arith.addf %25, %24 : vector<32x128xf32>
    %27 = arith.divf %25, %26 : vector<32x128xf32>
    %28 = arith.mulf %21, %27 : vector<32x128xf32>
    %29 = vector.broadcast %20 : vector<1x128xf32> to vector<32x128xf32>
    %30 = arith.mulf %28, %29 : vector<32x128xf32>
    %31 = vector.extract_strided_slice %18 {offsets = [32, 0], sizes = [32, 128], strides = [1, 1]} : vector<192x128xf32> to vector<32x128xf32>
    %32 = vector.extract_strided_slice %18 {offsets = [96, 0], sizes = [32, 128], strides = [1, 1]} : vector<192x128xf32> to vector<32x128xf32>
    %33 = arith.negf %32 : vector<32x128xf32>
    %34 = math.exp %33 : vector<32x128xf32>
    %cst_14 = arith.constant 1.000000e+00 : f32
    %35 = vector.broadcast %cst_14 : f32 to vector<32x128xf32>
    %36 = arith.addf %35, %34 : vector<32x128xf32>
    %37 = arith.divf %35, %36 : vector<32x128xf32>
    %38 = arith.mulf %31, %37 : vector<32x128xf32>
    %39 = vector.broadcast %20 : vector<1x128xf32> to vector<32x128xf32>
    %40 = arith.mulf %38, %39 : vector<32x128xf32>
    %41 = vector.extract_strided_slice %18 {offsets = [128, 0], sizes = [64, 128], strides = [1, 1]} : vector<192x128xf32> to vector<64x128xf32>
    %42 = arith.negf %41 : vector<64x128xf32>
    %43 = math.exp %42 : vector<64x128xf32>
    %cst_15 = arith.constant 1.000000e+00 : f32
    %44 = vector.broadcast %cst_15 : f32 to vector<64x128xf32>
    %45 = arith.addf %44, %43 : vector<64x128xf32>
    %46 = arith.divf %44, %45 : vector<64x128xf32>
    %47 = arith.truncf %30 : vector<32x128xf32> to vector<32x128xbf16>
    %c0_16 = arith.constant 0 : index
    %c0_17 = arith.constant 0 : index
    %c0_18 = arith.constant 0 : index
    %48 = vector.load %arg6[%c0_16, %c0_17, %c0_18] : memref<1x32x128xbf16, #tpu.memory_space<vmem>>, vector<1x32x128xbf16>
    %49 = vector.shape_cast %48 : vector<1x32x128xbf16> to vector<32x128xbf16>
    %50 = vector.shape_cast %47 : vector<32x128xbf16> to vector<1x32x128xbf16>
    tpu.vector_store %arg6[%c0_16, %c0_17, %c0_18], %50 {strides = array<i32>} : memref<1x32x128xbf16, #tpu.memory_space<vmem>>, vector<1x32x128xbf16>,
    %51 = arith.truncf %40 : vector<32x128xf32> to vector<32x128xbf16>
    %c0_19 = arith.constant 0 : index
    %c0_20 = arith.constant 0 : index
    %c0_21 = arith.constant 0 : index
    %52 = vector.load %arg7[%c0_19, %c0_20, %c0_21] : memref<1x32x128xbf16, #tpu.memory_space<vmem>>, vector<1x32x128xbf16>
    %53 = vector.shape_cast %52 : vector<1x32x128xbf16> to vector<32x128xbf16>
    %54 = vector.shape_cast %51 : vector<32x128xbf16> to vector<1x32x128xbf16>
    tpu.vector_store %arg7[%c0_19, %c0_20, %c0_21], %54 {strides = array<i32>} : memref<1x32x128xbf16, #tpu.memory_space<vmem>>, vector<1x32x128xbf16>,
    %c0_22 = arith.constant 0 : index
    %c0_23 = arith.constant 0 : index
    %c0_24 = arith.constant 0 : index
    %55 = vector.load %arg8[%c0_22, %c0_23, %c0_24] : memref<1x64x128xf32, #tpu.memory_space<vmem>>, vector<1x64x128xf32>
    %56 = vector.shape_cast %55 : vector<1x64x128xf32> to vector<64x128xf32>
    %57 = vector.shape_cast %46 : vector<64x128xf32> to vector<1x64x128xf32>
    tpu.vector_store %arg8[%c0_22, %c0_23, %c0_24], %57 {strides = array<i32>} : memref<1x64x128xf32, #tpu.memory_space<vmem>>, vector<1x64x128xf32>,
    return
  }
  func.func @transform_0(%arg0: i32, %arg1: i32) -> (i32, i32, i32, i32) {
    %c0_i32 = arith.constant 0 : i32
    %c0_i32_0 = arith.constant 0 : i32
    %c0_i32_1 = arith.constant 0 : i32
    return %arg0, %arg1, %c0_i32, %c0_i32_0 : i32, i32, i32, i32
  }
  func.func @transform_1(%arg0: i32, %arg1: i32) -> (i32, i32, i32) {
    %c0_i32 = arith.constant 0 : i32
    %c0_i32_0 = arith.constant 0 : i32
    return %arg0, %c0_i32, %arg1 : i32, i32, i32
  }
  func.func @transform_2(%arg0: i32, %arg1: i32) -> (i32, i32) {
    %c0_i32 = arith.constant 0 : i32
    %c0_i32_0 = arith.constant 0 : i32
    %c0_i32_1 = arith.constant 0 : i32
    return %c0_i32, %c0_i32_0 : i32, i32
  }
  func.func @transform_3(%arg0: i32, %arg1: i32) -> (i32, i32) {
    %c0_i32 = arith.constant 0 : i32
    %c0_i32_0 = arith.constant 0 : i32
    %c0_i32_1 = arith.constant 0 : i32
    return %c0_i32, %c0_i32_0 : i32, i32
  }
  func.func @transform_4(%arg0: i32, %arg1: i32) -> (i32, i32, i32) {
    %c0_i32 = arith.constant 0 : i32
    %c0_i32_0 = arith.constant 0 : i32
    return %arg0, %c0_i32, %arg1 : i32, i32, i32
  }
  func.func @transform_5(%arg0: i32, %arg1: i32) -> (i32, i32, i32) {
    %c0_i32 = arith.constant 0 : i32
    %c0_i32_0 = arith.constant 0 : i32
    return %arg0, %c0_i32, %arg1 : i32, i32, i32
  }
  func.func @transform_6(%arg0: i32, %arg1: i32) -> (i32, i32, i32) {
    %c0_i32 = arith.constant 0 : i32
    %c0_i32_0 = arith.constant 0 : i32
    return %arg0, %c0_i32, %arg1 : i32, i32, i32
  }
}

</mosaic_0001>

<llo_original>
// kernel: tpu_custom_call.1
$region0: #{tpu_custom_call.1}
  #allocation0 [shape = 'u32[]', space=smem, size = 0x4, offset = 0x4, fixed_abs, tag = 'smem constant byte address 0x4 - core index']
  #allocation1 [shape = 'u32[144,128]{1,0:T(1,128)}', space=vmem, size = 0x12000, scoped, tag = 'internal scratch']
  %s0 = inlined_call_operand.vmem [shape: f32[2,16,16,64], index: 0, kind: input, shape index: {}]
  %s1 = inlined_call_operand.hbm [shape: f32[2,1,256], index: 1, kind: input, shape index: {}]
  %s2 = inlined_call_operand.vmem [shape: f32[192,64], index: 2, kind: input, shape index: {}]
  %s3 = inlined_call_operand.vmem [shape: f32[192,1], index: 3, kind: input, shape index: {}]
  %s4 = inlined_call_operand.hbm [shape: bf16[2,32,256], index: 4, kind: output, shape index: {0}]
  %s5 = inlined_call_operand.hbm [shape: bf16[2,32,256], index: 5, kind: output, shape index: {1}]
  %s6 = inlined_call_operand.hbm [shape: f32[2,64,256], index: 6, kind: output, shape index: {2}]
  %7 = xla_tuple %s4, %s5, %s6
  %s8 = sld [smem:[#allocation0]]
  $region69: #{tpu_custom_call.1} parent=0
    _
  %s10 = ssub.s32 1, %s8
  %s11 = scalar_select 0, %s10, %s8
  $region1: #{tpu_custom_call.1} parent=0
    #allocation2 [shape = 'u8[1024]{0}', space=vmem, size = 0x400, scoped, tag = 'input window, operand 1']
    #allocation3 [shape = 's32[2]{0}', space=sflag, size = 0x8, scoped, tag = 'scoped memory for tpu_custom_call.1']
    #allocation4 [shape = 's32[2]{0}', space=sflag, size = 0x8, scoped, tag = 'scoped memory for tpu_custom_call.1']
    #allocation5 [shape = 'u8[16384]{0}', space=vmem, size = 0x4000, scoped, tag = 'output window, operand 0']
    #allocation6 [shape = 'u8[16384]{0}', space=vmem, size = 0x4000, scoped, tag = 'output window, operand 1']
    #allocation7 [shape = 's32[2]{0}', space=sflag, size = 0x8, scoped, tag = 'scoped memory for tpu_custom_call.1']
    #allocation8 [shape = 'u8[65536]{0}', space=vmem, size = 0x10000, scoped, tag = 'output window, operand 2']
    %12 = vsyncpa [#allocation3], 0
    %s13 = scalar_lea.sflag [#allocation3], 1
    %14 = vsyncpa %s13, 0
    %15 = vsyncpa [#allocation4], 0
    %s16 = scalar_lea.sflag [#allocation4], 1
    %17 = vsyncpa %s16, 0
    %18 = vsyncpa [#allocation7], 0
    %s19 = scalar_lea.sflag [#allocation7], 1
    %20 = vsyncpa %s19, 0
    loop: start=0, step=1, limit=6
    $region2: #{tpu_custom_call.1} parent=1 // loop_pre_header
      _
    $region3: #{tpu_custom_call.1} parent=1 // loop_header
      %s22 = sphi 0, %s26
      %p23 = scmp.ge.s32.totalorder %s22, 6
      %s29 = sphi 0, %s41
      %s30 = sphi 0, %s37
      %s31 = sphi 0, %s29
      %s32 = sphi 0, %s30
      %s33 = sphi 0, %s31
      %s34 = sphi 0, %s32
      %s46 = sphi 0, %s48
      %s49 = sphi 0, %s46
      %s50 = sphi 0, %s49
      %s66 = sphi 0, %s50
      %s74 = sphi 0, %s76
      %s77 = sphi 0, %s74
      %s78 = sphi 0, %s77
      %s94 = sphi 0, %s78
      %s98 = sphi 0, %s98
      %s100 = sphi 0, %s98
      %s101 = sphi 0, %s100
      %s115 = sphi 0, %s101
      %s119 = sphi 0, %s119
      %s121 = sphi 0, %s119
      %s122 = sphi 0, %s121
      %s136 = sphi 0, %s122
      %s144 = sphi 0, %s146
      %s147 = sphi 0, %s144
      %s148 = sphi 0, %s147
      %s164 = sphi 0, %s148
      %s172 = sphi 0, %s174
      %s175 = sphi 0, %s172
      %s176 = sphi 0, %s175
      %s192 = sphi 0, %s176
      %s200 = sphi 0, %s202
      %s203 = sphi 0, %s200
      %s204 = sphi 0, %s203
      %s220 = sphi 0, %s204
    $region4: #{tpu_custom_call.1} parent=1 // loop_header_branch
      %25 = sbr.rel (%p23) target = $region8
    $region5: #{tpu_custom_call.1} parent=1 // loop_body
      %s27 = ssub.s32 %s22, 1
      %s28 = ssub.s32 %s22, 2
      %s35 = sadd.s32 1, %s30
      %p36 = scmp.ge.s32.totalorder %s35, 2
      %s37 = scalar_select %p36, 0, %s35
      %s38 = sadd.s32 1, %s29
      %s39 = scalar_select %p36, %s38, %s29
      %p40 = scmp.ge.s32.totalorder %s39, 2
      %s41 = scalar_select %p40, 0, %s39
      %s42 = ssub.s32 %s29, %s41
      %s43 = ssub.s32 %s30, %s37
      %s44 = sor.u32 %s42, %s43
      %p45 = scmp.eq.s32.totalorder %s44, 0
      %s47 = sadd.s32 %s46, 1
      %s48 = scalar_select %p45, %s46, %s47
      %p51 = pneg %p45
      %p52 = scmp.eq.s32.totalorder %s22, 3
      %p53 = por %p51, %p52
      %p54 = scmp.ne.s32.totalorder %s46, %s49
      %p55 = scmp.eq.s32.totalorder %s22, 0
      %p56 = por %p54, %p55
      %p57 = scmp.ne.s32.totalorder %s46, %s49
      %p58 = scmp.eq.s32.totalorder %s27, 3
      %p59 = por %p57, %p58
      %p60 = scmp.ne.s32.totalorder %s49, %s50
      %p61 = scmp.eq.s32.totalorder %s27, 0
      %p62 = por %p60, %p61
      %p63 = scmp.ne.s32.totalorder %s49, %s50
      %p64 = scmp.eq.s32.totalorder %s28, 3
      %p65 = por %p63, %p64
      %p67 = scmp.ne.s32.totalorder %s50, %s66
      %p68 = scmp.eq.s32.totalorder %s28, 0
      %p69 = por %p67, %p68
      %s70 = ssub.s32 %s29, %s41
      %s71 = ssub.s32 %s30, %s37
      %s72 = sor.u32 %s70, %s71
      %p73 = scmp.eq.s32.totalorder %s72, 0
      %s75 = sadd.s32 %s74, 1
      %s76 = scalar_select %p73, %s74, %s75
      %p79 = pneg %p73
      %p80 = scmp.eq.s32.totalorder %s22, 3
      %p81 = por %p79, %p80
      %p82 = scmp.ne.s32.totalorder %s74, %s77
      %p83 = scmp.eq.s32.totalorder %s22, 0
      %p84 = por %p82, %p83
      %p85 = scmp.ne.s32.totalorder %s74, %s77
      %p86 = scmp.eq.s32.totalorder %s27, 3
      %p87 = por %p85, %p86
      %p88 = scmp.ne.s32.totalorder %s77, %s78
      %p89 = scmp.eq.s32.totalorder %s27, 0
      %p90 = por %p88, %p89
      %p91 = scmp.ne.s32.totalorder %s77, %s78
      %p92 = scmp.eq.s32.totalorder %s28, 3
      %p93 = por %p91, %p92
      %p95 = scmp.ne.s32.totalorder %s78, %s94
      %p96 = scmp.eq.s32.totalorder %s28, 0
      %p97 = por %p95, %p96
      %s99 = sadd.s32 %s98, 1
      %p102 = scmp.eq.s32.totalorder %s22, 3
      %p103 = scmp.ne.s32.totalorder %s98, %s100
      %p104 = scmp.eq.s32.totalorder %s22, 0
      %p105 = por %p103, %p104
      %p106 = scmp.ne.s32.totalorder %s98, %s100
      %p107 = scmp.eq.s32.totalorder %s27, 3
      %p108 = por %p106, %p107
      %p109 = scmp.ne.s32.totalorder %s100, %s101
      %p110 = scmp.eq.s32.totalorder %s27, 0
      %p111 = por %p109, %p110
      %p112 = scmp.ne.s32.totalorder %s100, %s101
      %p113 = scmp.eq.s32.totalorder %s28, 3
      %p114 = por %p112, %p113
      %p116 = scmp.ne.s32.totalorder %s101, %s115
      %p117 = scmp.eq.s32.totalorder %s28, 0
      %p118 = por %p116, %p117
      %s120 = sadd.s32 %s119, 1
      %p123 = scmp.eq.s32.totalorder %s22, 3
      %p124 = scmp.ne.s32.totalorder %s119, %s121
      %p125 = scmp.eq.s32.totalorder %s22, 0
      %p126 = por %p124, %p125
      %p127 = scmp.ne.s32.totalorder %s119, %s121
      %p128 = scmp.eq.s32.totalorder %s27, 3
      %p129 = por %p127, %p128
      %p130 = scmp.ne.s32.totalorder %s121, %s122
      %p131 = scmp.eq.s32.totalorder %s27, 0
      %p132 = por %p130, %p131
      %p133 = scmp.ne.s32.totalorder %s121, %s122
      %p134 = scmp.eq.s32.totalorder %s28, 3
      %p135 = por %p133, %p134
      %p137 = scmp.ne.s32.totalorder %s122, %s136
      %p138 = scmp.eq.s32.totalorder %s28, 0
      %p139 = por %p137, %p138
      %s140 = ssub.s32 %s29, %s41
      %s141 = ssub.s32 %s30, %s37
      %s142 = sor.u32 %s140, %s141
      %p143 = scmp.eq.s32.totalorder %s142, 0
      %s145 = sadd.s32 %s144, 1
      %s146 = scalar_select %p143, %s144, %s145
      %p149 = pneg %p143
      %p150 = scmp.eq.s32.totalorder %s22, 3
      %p151 = por %p149, %p150
      %p152 = scmp.ne.s32.totalorder %s144, %s147
      %p153 = scmp.eq.s32.totalorder %s22, 0
      %p154 = por %p152, %p153
      %p155 = scmp.ne.s32.totalorder %s144, %s147
      %p156 = scmp.eq.s32.totalorder %s27, 3
      %p157 = por %p155, %p156
      %p158 = scmp.ne.s32.totalorder %s147, %s148
      %p159 = scmp.eq.s32.totalorder %s27, 0
      %p160 = por %p158, %p159
      %p161 = scmp.ne.s32.totalorder %s147, %s148
      %p162 = scmp.eq.s32.totalorder %s28, 3
      %p163 = por %p161, %p162
      %p165 = scmp.ne.s32.totalorder %s148, %s164
      %p166 = scmp.eq.s32.totalorder %s28, 0
      %p167 = por %p165, %p166
      %s168 = ssub.s32 %s29, %s41
      %s169 = ssub.s32 %s30, %s37
      %s170 = sor.u32 %s168, %s169
      %p171 = scmp.eq.s32.totalorder %s170, 0
      %s173 = sadd.s32 %s172, 1
      %s174 = scalar_select %p171, %s172, %s173
      %p177 = pneg %p171
      %p178 = scmp.eq.s32.totalorder %s22, 3
      %p179 = por %p177, %p178
      %p180 = scmp.ne.s32.totalorder %s172, %s175
      %p181 = scmp.eq.s32.totalorder %s22, 0
      %p182 = por %p180, %p181
      %p183 = scmp.ne.s32.totalorder %s172, %s175
      %p184 = scmp.eq.s32.totalorder %s27, 3
      %p185 = por %p183, %p184
      %p186 = scmp.ne.s32.totalorder %s175, %s176
      %p187 = scmp.eq.s32.totalorder %s27, 0
      %p188 = por %p186, %p187
      %p189 = scmp.ne.s32.totalorder %s175, %s176
      %p190 = scmp.eq.s32.totalorder %s28, 3
      %p191 = por %p189, %p190
      %p193 = scmp.ne.s32.totalorder %s176, %s192
      %p194 = scmp.eq.s32.totalorder %s28, 0
      %p195 = por %p193, %p194
      %s196 = ssub.s32 %s29, %s41
      %s197 = ssub.s32 %s30, %s37
      %s198 = sor.u32 %s196, %s197
      %p199 = scmp.eq.s32.totalorder %s198, 0
      %s201 = sadd.s32 %s200, 1
      %s202 = scalar_select %p199, %s200, %s201
      %p205 = pneg %p199
      %p206 = scmp.eq.s32.totalorder %s22, 3
      %p207 = por %p205, %p206
      %p208 = scmp.ne.s32.totalorder %s200, %s203
      %p209 = scmp.eq.s32.totalorder %s22, 0
      %p210 = por %p208, %p209
      %p211 = scmp.ne.s32.totalorder %s200, %s203
      %p212 = scmp.eq.s32.totalorder %s27, 3
      %p213 = por %p211, %p212
      %p214 = scmp.ne.s32.totalorder %s203, %s204
      %p215 = scmp.eq.s32.totalorder %s27, 0
      %p216 = por %p214, %p215
      %p217 = scmp.ne.s32.totalorder %s203, %s204
      %p218 = scmp.eq.s32.totalorder %s28, 3
      %p219 = por %p217, %p218
      %p221 = scmp.ne.s32.totalorder %s204, %s220
      %p222 = scmp.eq.s32.totalorder %s28, 0
      %p223 = por %p221, %p222
      %p224 = scmp.le.s32.totalorder 1, %s22
      %p225 = scmp.lt.s32.totalorder %s22, 5
      %p226 = pnand %p224, %p225
      %p227 = pneg %p226
      // Predicated region
      $region9: #{tpu_custom_call.1} parent=5 // pred_check
        _
      $region10: #{tpu_custom_call.1} parent=5 // pred_check_branch
        %229 = sbr.rel (%p226) target = $region12
      $region11: #{tpu_custom_call.1} parent=5 // pred_region
        %s230 = ssub.s32 %s22, 1
        // Predicated region
        $region13: #{tpu_custom_call.1} parent=11 // pred_check
          %p231 = pneg %p111
        $region14: #{tpu_custom_call.1} parent=11 // pred_check_branch
          %233 = sbr.rel (%p231) target = $region16
        $region15: #{tpu_custom_call.1} parent=11 // pred_region
          _
        $region16: #{tpu_custom_call.1} parent=11 // pred_fallthru
          _
        // Predicated region
        $region17: #{tpu_custom_call.1} parent=11 // pred_check
          %p234 = pneg %p132
        $region18: #{tpu_custom_call.1} parent=11 // pred_check_branch
          %236 = sbr.rel (%p234) target = $region20
        $region19: #{tpu_custom_call.1} parent=11 // pred_region
          _
        $region20: #{tpu_custom_call.1} parent=11 // pred_fallthru
          _
      $region12: #{tpu_custom_call.1} parent=5 // pred_fallthru
        _
      %p237 = scmp.lt.s32.totalorder %s22, 4
      // Predicated region
      $region21: #{tpu_custom_call.1} parent=5 // pred_check
        %p238 = pneg %p237
      $region22: #{tpu_custom_call.1} parent=5 // pred_check_branch
        %240 = sbr.rel (%p238) target = $region24
      $region23: #{tpu_custom_call.1} parent=5 // pred_region
        // Predicated region
        $region25: #{tpu_custom_call.1} parent=23 // pred_check
          %p241 = pneg %p56
        $region26: #{tpu_custom_call.1} parent=23 // pred_check_branch
          %243 = sbr.rel (%p241) target = $region28
        $region27: #{tpu_custom_call.1} parent=23 // pred_region
          %s244 = smul.u32 8, %s30
          %p245 = scmp.lt.s32.totalorder %s29, 1
          %s246 = scalar_select %p245, %s29, 1
          %p247 = scmp.lt.s32.totalorder %s244, 15
          %s248 = scalar_select %p247, %s244, 15
          %s249 = smul.addr %s248, 2
          %s250 = smul.addr %s246, 32
          %s251 = sadd.s32 %s249, %s250
          %s252 = smul.addr %s251, 8
          %s253 = scalar_lea.vmem %s0, %s252
          %s254 = smul.u32 8, %s30
        $region28: #{tpu_custom_call.1} parent=23 // pred_fallthru
          _
        // Predicated region
        $region29: #{tpu_custom_call.1} parent=23 // pred_check
          %p255 = pneg %p84
        $region30: #{tpu_custom_call.1} parent=23 // pred_check_branch
          %257 = sbr.rel (%p255) target = $region32
        $region31: #{tpu_custom_call.1} parent=23 // pred_region
          %s258 = sand.u32 %s74, 1
          %s259 = scalar_lea.sflag [#allocation3], %s258
          %s260 = sand.u32 %s74, 1
          %s261 = scalar_lea.vmem [#allocation2], %s260
          %s263 = ssub.s32 16, 16
          %264 = vsyncadd %s259, %s263
          %s265 = smul.addr %s29, 2
          %s266 = sadd.s32 %s30, %s265
          %s267 = smul.addr %s266, 16
          %s268 = scalar_lea.hbm %s1, %s267
          %s270 = sshll.u32 %s261, 4
          %s271 = int_to_ptr.vmem [resolvable:$true] %s270
          %273 = dma.hbm_to_vmem [thread:$0]  %s268, 16, %s271, %s259
        $region32: #{tpu_custom_call.1} parent=23 // pred_fallthru
          _
      $region24: #{tpu_custom_call.1} parent=5 // pred_fallthru
        _
      %p274 = scmp.le.s32.totalorder 1, %s22
      %p275 = scmp.lt.s32.totalorder %s22, 5
      %p276 = pnand %p274, %p275
      %p277 = pneg %p276
      // Predicated region
      $region33: #{tpu_custom_call.1} parent=5 // pred_check
        _
      $region34: #{tpu_custom_call.1} parent=5 // pred_check_branch
        %279 = sbr.rel (%p276) target = $region36
      $region35: #{tpu_custom_call.1} parent=5 // pred_region
        %s280 = ssub.s32 %s22, 1
        %s281 = sand.u32 %s77, 1
        %s282 = scalar_lea.sflag [#allocation3], %s281
        %s283 = sand.u32 %s77, 1
        %s284 = scalar_lea.vmem [#allocation2], %s283
        // Predicated region
        $region37: #{tpu_custom_call.1} parent=35 // pred_check
          %p285 = pneg %p90
        $region38: #{tpu_custom_call.1} parent=35 // pred_check_branch
          %287 = sbr.rel (%p285) target = $region40
        $region39: #{tpu_custom_call.1} parent=35 // pred_region
          %288 = dma.done %s282, 16
        $region40: #{tpu_custom_call.1} parent=35 // pred_fallthru
          _
        %s289 = smul.u32 8, %s32
        %p290 = scmp.lt.s32.totalorder %s31, 1
        %s291 = scalar_select %p290, %s31, 1
        %p292 = scmp.lt.s32.totalorder %s289, 15
        %s293 = scalar_select %p292, %s289, 15
        %s294 = smul.addr %s293, 2
        %s295 = smul.addr %s291, 32
        %s296 = sadd.s32 %s294, %s295
        %s297 = smul.addr %s296, 8
        %s298 = scalar_lea.vmem %s0, %s297
        %p299 = pneg %p62
        %p300 = pneg %p59
        %s301 = sand.u32 %s77, 1
        %s302 = scalar_lea.sflag [#allocation3], %s301
        %s303 = sand.u32 %s77, 1
        %s304 = scalar_lea.vmem [#allocation2], %s303
        %p305 = pneg %p90
        %p306 = pneg %p87
        %p307 = pneg %p111
        %p308 = pneg %p108
        %p309 = pneg %p132
        %p310 = pneg %p129
        %p311 = pneg %p160
        %p312 = pneg %p157
        %s313 = sand.u32 %s147, 1
        %s314 = scalar_lea.sflag [#allocation4], %s313
        %s315 = sand.u32 %s147, 1
        %s316 = smul.addr %s315, 16
        %s317 = scalar_lea.vmem [#allocation5], %s316
        %p318 = pneg %p188
        %p319 = pneg %p185
        %s320 = sand.u32 %s27, 1
        %s321 = scalar_lea.sflag [#allocation7], %s320
        %s322 = sand.u32 %s175, 1
        %s323 = smul.addr %s322, 16
        %s324 = scalar_lea.vmem [#allocation6], %s323
        %p325 = pneg %p216
        %p326 = pneg %p213
        %s327 = sand.u32 %s27, 1
        %s328 = scalar_lea.sflag [#allocation7], %s327
        %s329 = sand.u32 %s203, 1
        %s330 = smul.addr %s329, 64
        %s331 = scalar_lea.vmem [#allocation8], %s330
        %s332 = smul.u32 8, %s32
        %p333 = scmp.lt.s32.totalorder %s31, 1
        %s334 = scalar_select %p333, %s31, 1
        %p335 = scmp.lt.s32.totalorder %s332, 15
        %s336 = scalar_select %p335, %s332, 15
        %s337 = smul.addr %s336, 2
        %s338 = smul.addr %s334, 32
        %s339 = sadd.s32 %s337, %s338
        %s340 = smul.addr %s339, 8
        %s341 = scalar_lea.vmem %s0, %s340
        %s342 = smul.u32 8, %s32
        %v343 = vld [vmem:[%s341] sm:$0xff]
        %v344 = vld [vmem:[%s341 + $0x8] sm:$0xff]
        %v345 = vld [vmem:[%s341 + $0x10] sm:$0xff]
        %v346 = vld [vmem:[%s341 + $0x18] sm:$0xff]
        %v347 = vld [vmem:[%s341 + $0x20] sm:$0xff]
        %v348 = vld [vmem:[%s341 + $0x28] sm:$0xff]
        %v349 = vld [vmem:[%s341 + $0x30] sm:$0xff]
        %v350 = vld [vmem:[%s341 + $0x38] sm:$0xff]
        %v351 = vld [vmem:[%s341 + $0x40] sm:$0xff]
        %v352 = vld [vmem:[%s341 + $0x48] sm:$0xff]
        %v353 = vld [vmem:[%s341 + $0x50] sm:$0xff]
        %v354 = vld [vmem:[%s341 + $0x58] sm:$0xff]
        %v355 = vld [vmem:[%s341 + $0x60] sm:$0xff]
        %v356 = vld [vmem:[%s341 + $0x68] sm:$0xff]
        %v357 = vld [vmem:[%s341 + $0x70] sm:$0xff]
        %v358 = vld [vmem:[%s341 + $0x78] sm:$0xff]
        %359 = vxpose.xlu0.b32.start [1/16] %v343, 128
        %360 = vxpose.xlu0.b32.cont [2/16] %v344, 128
        %361 = vxpose.xlu0.b32.cont [3/16] %v345, 128
        %362 = vxpose.xlu0.b32.cont [4/16] %v346, 128
        %363 = vxpose.xlu0.b32.cont [5/16] %v347, 128
        %364 = vxpose.xlu0.b32.cont [6/16] %v348, 128
        %365 = vxpose.xlu0.b32.cont [7/16] %v349, 128
        %366 = vxpose.xlu0.b32.cont [8/16] %v350, 128
        %367 = vxpose.xlu0.b32.cont [9/16] %v351, 128
        %368 = vxpose.xlu0.b32.cont [10/16] %v352, 128
        %369 = vxpose.xlu0.b32.cont [11/16] %v353, 128
        %370 = vxpose.xlu0.b32.cont [12/16] %v354, 128
        %371 = vxpose.xlu0.b32.cont [13/16] %v355, 128
        %372 = vxpose.xlu0.b32.cont [14/16] %v356, 128
        %373 = vxpose.xlu0.b32.cont [15/16] %v357, 128
        %374 = vxpose.xlu0.b32.end [16/16] %v358, 128
        %v375 = vpop.trf.xlu0
        %v376 = vpop.trf.xlu0
        %v377 = vpop.trf.xlu0
        %v378 = vpop.trf.xlu0
        %v379 = vpop.trf.xlu0
        %v380 = vpop.trf.xlu0
        %v381 = vpop.trf.xlu0
        %v382 = vpop.trf.xlu0
        %v383 = vpop.trf.xlu0
        %v384 = vpop.trf.xlu0
        %v385 = vpop.trf.xlu0
        %v386 = vpop.trf.xlu0
        %v387 = vpop.trf.xlu0
        %v388 = vpop.trf.xlu0
        %v389 = vpop.trf.xlu0
        %v390 = vpop.trf.xlu0
        %v391 = vmul.f32 %v375, %v375
        %v392 = vmul.f32 %v376, %v376
        %v393 = vmul.f32 %v377, %v377
        %v394 = vmul.f32 %v378, %v378
        %v395 = vmul.f32 %v379, %v379
        %v396 = vmul.f32 %v380, %v380
        %v397 = vmul.f32 %v381, %v381
        %v398 = vmul.f32 %v382, %v382
        %v399 = vadd.f32 %v391, %v392
        %v400 = vadd.f32 %v399, %v393
        %v401 = vadd.f32 %v400, %v394
        %v402 = vadd.f32 %v401, %v395
        %v403 = vadd.f32 %v402, %v396
        %v404 = vadd.f32 %v403, %v397
        %v405 = vadd.f32 %v404, %v398
        %v406 = vrot.slane %v405, 4
        %v407 = vadd.f32 %v405, %v406
        %v408 = vrot.slane %v407, 2
        %v409 = vadd.f32 %v407, %v408
        %v410 = vrot.slane %v409, 1
        %v411 = vadd.f32 %v409, %v410
        %v412 = vrcp.pop 64.0
        %v413 = vmul.f32 %v411, %v412
        %v414 = vadd.f32 %v413, 1e-06
        %v415 = vrsqrt.pop %v414
        %v416 = vmul.f32 %v375, %v415
        %v417 = vmul.f32 %v376, %v415
        %v418 = vmul.f32 %v377, %v415
        %v419 = vmul.f32 %v378, %v415
        %v420 = vmul.f32 %v379, %v415
        %v421 = vmul.f32 %v380, %v415
        %v422 = vmul.f32 %v381, %v415
        %v423 = vmul.f32 %v382, %v415
        %v424 = vld [vmem:[%s2] sm:$0xff]
        %v425 = vld [vmem:[%s2 + $0x8] sm:$0xff]
        %v426 = vld [vmem:[%s2 + $0x10] sm:$0xff]
        %v427 = vld [vmem:[%s2 + $0x18] sm:$0xff]
        %v428 = vld [vmem:[%s2 + $0x20] sm:$0xff]
        %v429 = vld [vmem:[%s2 + $0x28] sm:$0xff]
        %v430 = vld [vmem:[%s2 + $0x30] sm:$0xff]
        %v431 = vld [vmem:[%s2 + $0x38] sm:$0xff]
        %v432 = vld [vmem:[%s2 + $0x40] sm:$0xff]
        %v433 = vld [vmem:[%s2 + $0x48] sm:$0xff]
        %v434 = vld [vmem:[%s2 + $0x50] sm:$0xff]
        %v435 = vld [vmem:[%s2 + $0x58] sm:$0xff]
        %v436 = vld [vmem:[%s2 + $0x60] sm:$0xff]
        %v437 = vld [vmem:[%s2 + $0x68] sm:$0xff]
        %v438 = vld [vmem:[%s2 + $0x70] sm:$0xff]
        %v439 = vld [vmem:[%s2 + $0x78] sm:$0xff]
        %v440 = vld [vmem:[%s2 + $0x80] sm:$0xff]
        %v441 = vld [vmem:[%s2 + $0x88] sm:$0xff]
        %v442 = vld [vmem:[%s2 + $0x90] sm:$0xff]
        %v443 = vld [vmem:[%s2 + $0x98] sm:$0xff]
        %v444 = vld [vmem:[%s2 + $0xa0] sm:$0xff]
        %v445 = vld [vmem:[%s2 + $0xa8] sm:$0xff]
        %v446 = vld [vmem:[%s2 + $0xb0] sm:$0xff]
        %v447 = vld [vmem:[%s2 + $0xb8] sm:$0xff]
        %v448 = vld [vmem:[%s3] sm:$0xff]
        %v449 = vld [vmem:[%s3 + $0x8] sm:$0xff]
        %v450 = vld [vmem:[%s3 + $0x10] sm:$0xff]
        %v451 = vld [vmem:[%s3 + $0x18] sm:$0xff]
        %v452 = vld [vmem:[%s3 + $0x20] sm:$0xff]
        %v453 = vld [vmem:[%s3 + $0x28] sm:$0xff]
        %v454 = vld [vmem:[%s3 + $0x30] sm:$0xff]
        %v455 = vld [vmem:[%s3 + $0x38] sm:$0xff]
        %v456 = vld [vmem:[%s3 + $0x40] sm:$0xff]
        %v457 = vld [vmem:[%s3 + $0x48] sm:$0xff]
        %v458 = vld [vmem:[%s3 + $0x50] sm:$0xff]
        %v459 = vld [vmem:[%s3 + $0x58] sm:$0xff]
        %v460 = vld [vmem:[%s3 + $0x60] sm:$0xff]
        %v461 = vld [vmem:[%s3 + $0x68] sm:$0xff]
        %v462 = vld [vmem:[%s3 + $0x70] sm:$0xff]
        %v463 = vld [vmem:[%s3 + $0x78] sm:$0xff]
        %v464 = vld [vmem:[%s3 + $0x80] sm:$0xff]
        %v465 = vld [vmem:[%s3 + $0x88] sm:$0xff]
        %v466 = vld [vmem:[%s3 + $0x90] sm:$0xff]
        %v467 = vld [vmem:[%s3 + $0x98] sm:$0xff]
        %v468 = vld [vmem:[%s3 + $0xa0] sm:$0xff]
        %v469 = vld [vmem:[%s3 + $0xa8] sm:$0xff]
        %v470 = vld [vmem:[%s3 + $0xb0] sm:$0xff]
        %v471 = vld [vmem:[%s3 + $0xb8] sm:$0xff]
        %473 = vset.pattern.permute.xlu0 0
        %474 = vperm.xlu0 %473, %v448
        %v475 = vpop.permute.xlu0 %474
        %478 = vset.pattern.permute.xlu0 0
        %479 = vperm.xlu0 %478, %v449
        %v480 = vpop.permute.xlu0 %479
        %483 = vset.pattern.permute.xlu0 0
        %484 = vperm.xlu0 %483, %v450
        %v485 = vpop.permute.xlu0 %484
        %488 = vset.pattern.permute.xlu0 0
        %489 = vperm.xlu0 %488, %v451
        %v490 = vpop.permute.xlu0 %489
        %493 = vset.pattern.permute.xlu0 0
        %494 = vperm.xlu0 %493, %v452
        %v495 = vpop.permute.xlu0 %494
        %498 = vset.pattern.permute.xlu0 0
        %499 = vperm.xlu0 %498, %v453
        %v500 = vpop.permute.xlu0 %499
        %503 = vset.pattern.permute.xlu0 0
        %504 = vperm.xlu0 %503, %v454
        %v505 = vpop.permute.xlu0 %504
        %508 = vset.pattern.permute.xlu0 0
        %509 = vperm.xlu0 %508, %v455
        %v510 = vpop.permute.xlu0 %509
        %513 = vset.pattern.permute.xlu0 0
        %514 = vperm.xlu0 %513, %v456
        %v515 = vpop.permute.xlu0 %514
        %518 = vset.pattern.permute.xlu0 0
        %519 = vperm.xlu0 %518, %v457
        %v520 = vpop.permute.xlu0 %519
        %523 = vset.pattern.permute.xlu0 0
        %524 = vperm.xlu0 %523, %v458
        %v525 = vpop.permute.xlu0 %524
        %528 = vset.pattern.permute.xlu0 0
        %529 = vperm.xlu0 %528, %v459
        %v530 = vpop.permute.xlu0 %529
        %533 = vset.pattern.permute.xlu0 0
        %534 = vperm.xlu0 %533, %v460
        %v535 = vpop.permute.xlu0 %534
        %538 = vset.pattern.permute.xlu0 0
        %539 = vperm.xlu0 %538, %v461
        %v540 = vpop.permute.xlu0 %539
        %543 = vset.pattern.permute.xlu0 0
        %544 = vperm.xlu0 %543, %v462
        %v545 = vpop.permute.xlu0 %544
        %548 = vset.pattern.permute.xlu0 0
        %549 = vperm.xlu0 %548, %v463
        %v550 = vpop.permute.xlu0 %549
        %553 = vset.pattern.permute.xlu0 0
        %554 = vperm.xlu0 %553, %v464
        %v555 = vpop.permute.xlu0 %554
        %558 = vset.pattern.permute.xlu0 0
        %559 = vperm.xlu0 %558, %v465
        %v560 = vpop.permute.xlu0 %559
        %563 = vset.pattern.permute.xlu0 0
        %564 = vperm.xlu0 %563, %v466
        %v565 = vpop.permute.xlu0 %564
        %568 = vset.pattern.permute.xlu0 0
        %569 = vperm.xlu0 %568, %v467
        %v570 = vpop.permute.xlu0 %569
        %573 = vset.pattern.permute.xlu0 0
        %574 = vperm.xlu0 %573, %v468
        %v575 = vpop.permute.xlu0 %574
        %578 = vset.pattern.permute.xlu0 0
        %579 = vperm.xlu0 %578, %v469
        %v580 = vpop.permute.xlu0 %579
        %583 = vset.pattern.permute.xlu0 0
        %584 = vperm.xlu0 %583, %v470
        %v585 = vpop.permute.xlu0 %584
        %588 = vset.pattern.permute.xlu0 0
        %589 = vperm.xlu0 %588, %v471
        %v590 = vpop.permute.xlu0 %589
        %vm592 = vcmask 523264
        %v594 = vsel %vm592, %v424, 0
        %v597 = vsel %vm592, %v425, 0
        %v600 = vsel %vm592, %v426, 0
        %v603 = vsel %vm592, %v427, 0
        %v606 = vsel %vm592, %v428, 0
        %v609 = vsel %vm592, %v429, 0
        %v612 = vsel %vm592, %v430, 0
        %v615 = vsel %vm592, %v431, 0
        %v618 = vsel %vm592, %v432, 0
        %v621 = vsel %vm592, %v433, 0
        %v624 = vsel %vm592, %v434, 0
        %v627 = vsel %vm592, %v435, 0
        %v630 = vsel %vm592, %v436, 0
        %v633 = vsel %vm592, %v437, 0
        %v636 = vsel %vm592, %v438, 0
        %v639 = vsel %vm592, %v439, 0
        %v642 = vsel %vm592, %v440, 0
        %v645 = vsel %vm592, %v441, 0
        %v648 = vsel %vm592, %v442, 0
        %v651 = vsel %vm592, %v443, 0
        %v654 = vsel %vm592, %v444, 0
        %v657 = vsel %vm592, %v445, 0
        %v660 = vsel %vm592, %v446, 0
        %v663 = vsel %vm592, %v447, 0
        %665 = vmatprep.subr.mxu0 0.0
        %666 = vmatpush1.msra.mxu0 %v416
        %667 = vmatprep.subr.mxu0 0.0
        %668 = vmatpush1.msra.mxu0 %v417
        %669 = vmatprep.subr.mxu0 0.0
        %670 = vmatpush1.msra.mxu0 %v418
        %671 = vmatprep.subr.mxu0 0.0
        %672 = vmatpush1.msra.mxu0 %v419
        %673 = vmatprep.subr.mxu0 0.0
        %674 = vmatpush1.msra.mxu0 %v420
        %675 = vmatprep.subr.mxu0 0.0
        %676 = vmatpush1.msra.mxu0 %v421
        %677 = vmatprep.subr.mxu0 0.0
        %678 = vmatpush1.msra.mxu0 %v422
        %679 = vmatprep.subr.mxu0 0.0
        %680 = vmatpush1.msra.mxu0 %v423
        %681 = vmatprep.subr.mxu0 0.0
        %682 = vmatpush1.msra.mxu0 0.0
        %683 = vmatprep.subr.mxu0 0.0
        %684 = vmatpush1.msra.mxu0 0.0
        %685 = vmatprep.subr.mxu0 0.0
        %686 = vmatpush1.msra.mxu0 0.0
        %687 = vmatprep.subr.mxu0 0.0
        %688 = vmatpush1.msra.mxu0 0.0
        %689 = vmatprep.subr.mxu0 0.0
        %690 = vmatpush1.msra.mxu0 0.0
        %691 = vmatprep.subr.mxu0 0.0
        %692 = vmatpush1.msra.mxu0 0.0
        %693 = vmatprep.subr.mxu0 0.0
        %694 = vmatpush1.msra.mxu0 0.0
        %695 = vmatprep.subr.mxu0 0.0
        %696 = vmatpush1.msra.mxu0 0.0
        %697 = vmatprep.subr.mxu0 0.0
        %698 = vmatpush1.msra.mxu0 0.0
        %699 = vmatprep.subr.mxu0 0.0
        %700 = vmatpush1.msra.mxu0 0.0
        %701 = vmatprep.subr.mxu0 0.0
        %702 = vmatpush1.msra.mxu0 0.0
        %703 = vmatprep.subr.mxu0 0.0
        %704 = vmatpush1.msra.mxu0 0.0
        %705 = vmatprep.subr.mxu0 0.0
        %706 = vmatpush1.msra.mxu0 0.0
        %707 = vmatprep.subr.mxu0 0.0
        %708 = vmatpush1.msra.mxu0 0.0
        %709 = vmatprep.subr.mxu0 0.0
        %710 = vmatpush1.msra.mxu0 0.0
        %711 = vmatprep.subr.mxu0 0.0
        %712 = vmatpush1.msra.mxu0 0.0
        %713 = vmatprep.subr.mxu0 0.0
        %714 = vmatpush1.msra.mxu0 0.0
        %715 = vmatprep.subr.mxu0 0.0
        %716 = vmatpush1.msra.mxu0 0.0
        %717 = vmatprep.subr.mxu0 0.0
        %718 = vmatpush1.msra.mxu0 0.0
        %719 = vmatprep.subr.mxu0 0.0
        %720 = vmatpush1.msra.mxu0 0.0
        %721 = vmatprep.subr.mxu0 0.0
        %722 = vmatpush1.msra.mxu0 0.0
        %723 = vmatprep.subr.mxu0 0.0
        %724 = vmatpush1.msra.mxu0 0.0
        %725 = vmatprep.subr.mxu0 0.0
        %726 = vmatpush1.msra.mxu0 0.0
        %727 = vmatprep.subr.mxu0 0.0
        %728 = vmatpush1.msra.mxu0 0.0
        %729 = vmatprep.mubr.f32.mxu0 0.0
        %730 = vmatmul.mubr.f32.gmra.mrb[0].mxu0 %v594
        %v731 = vpop.f32.mrb[0].mxu0
        %v732 = vadd.f32 %v475, %v731
        %v733 = vpop.f32.mrb[0].mxu0
        %734 = vmatprep.mubr.f32.mxu0 0.0
        %735 = vmatmul.mubr.f32.gmra.mrb[0].mxu0 %v597
        %v736 = vpop.f32.mrb[0].mxu0
        %v737 = vadd.f32 %v480, %v736
        %v738 = vpop.f32.mrb[0].mxu0
        %739 = vmatprep.mubr.f32.mxu0 0.0
        %740 = vmatmul.mubr.f32.gmra.mrb[0].mxu0 %v600
        %v741 = vpop.f32.mrb[0].mxu0
        %v742 = vadd.f32 %v485, %v741
        %v743 = vpop.f32.mrb[0].mxu0
        %744 = vmatprep.mubr.f32.mxu0 0.0
        %745 = vmatmul.mubr.f32.gmra.mrb[0].mxu0 %v603
        %v746 = vpop.f32.mrb[0].mxu0
        %v747 = vadd.f32 %v490, %v746
        %v748 = vpop.f32.mrb[0].mxu0
        %749 = vmatprep.mubr.f32.mxu0 0.0
        %750 = vmatmul.mubr.f32.gmra.mrb[0].mxu0 %v606
        %v751 = vpop.f32.mrb[0].mxu0
        %v752 = vadd.f32 %v495, %v751
        %v753 = vpop.f32.mrb[0].mxu0
        %754 = vmatprep.mubr.f32.mxu0 0.0
        %755 = vmatmul.mubr.f32.gmra.mrb[0].mxu0 %v609
        %v756 = vpop.f32.mrb[0].mxu0
        %v757 = vadd.f32 %v500, %v756
        %v758 = vpop.f32.mrb[0].mxu0
        %759 = vmatprep.mubr.f32.mxu0 0.0
        %760 = vmatmul.mubr.f32.gmra.mrb[0].mxu0 %v612
        %v761 = vpop.f32.mrb[0].mxu0
        %v762 = vadd.f32 %v505, %v761
        %v763 = vpop.f32.mrb[0].mxu0
        %764 = vmatprep.mubr.f32.mxu0 0.0
        %765 = vmatmul.mubr.f32.gmra.mrb[0].mxu0 %v615
        %v766 = vpop.f32.mrb[0].mxu0
        %v767 = vadd.f32 %v510, %v766
        %v768 = vpop.f32.mrb[0].mxu0
        %769 = vmatprep.mubr.f32.mxu0 0.0
        %770 = vmatmul.mubr.f32.gmra.mrb[0].mxu0 %v618
        %v771 = vpop.f32.mrb[0].mxu0
        %v772 = vadd.f32 %v515, %v771
        %v773 = vpop.f32.mrb[0].mxu0
        %774 = vmatprep.mubr.f32.mxu0 0.0
        %775 = vmatmul.mubr.f32.gmra.mrb[0].mxu0 %v621
        %v776 = vpop.f32.mrb[0].mxu0
        %v777 = vadd.f32 %v520, %v776
        %v778 = vpop.f32.mrb[0].mxu0
        %779 = vmatprep.mubr.f32.mxu0 0.0
        %780 = vmatmul.mubr.f32.gmra.mrb[0].mxu0 %v624
        %v781 = vpop.f32.mrb[0].mxu0
        %v782 = vadd.f32 %v525, %v781
        %v783 = vpop.f32.mrb[0].mxu0
        %784 = vmatprep.mubr.f32.mxu0 0.0
        %785 = vmatmul.mubr.f32.gmra.mrb[0].mxu0 %v627
        %v786 = vpop.f32.mrb[0].mxu0
        %v787 = vadd.f32 %v530, %v786
        %v788 = vpop.f32.mrb[0].mxu0
        %789 = vmatprep.mubr.f32.mxu0 0.0
        %790 = vmatmul.mubr.f32.gmra.mrb[0].mxu0 %v630
        %v791 = vpop.f32.mrb[0].mxu0
        %v792 = vadd.f32 %v535, %v791
        %v793 = vpop.f32.mrb[0].mxu0
        %794 = vmatprep.mubr.f32.mxu0 0.0
        %795 = vmatmul.mubr.f32.gmra.mrb[0].mxu0 %v633
        %v796 = vpop.f32.mrb[0].mxu0
        %v797 = vadd.f32 %v540, %v796
        %v798 = vpop.f32.mrb[0].mxu0
        %799 = vmatprep.mubr.f32.mxu0 0.0
        %800 = vmatmul.mubr.f32.gmra.mrb[0].mxu0 %v636
        %v801 = vpop.f32.mrb[0].mxu0
        %v802 = vadd.f32 %v545, %v801
        %v803 = vpop.f32.mrb[0].mxu0
        %804 = vmatprep.mubr.f32.mxu0 0.0
        %805 = vmatmul.mubr.f32.gmra.mrb[0].mxu0 %v639
        %v806 = vpop.f32.mrb[0].mxu0
        %v807 = vadd.f32 %v550, %v806
        %v808 = vpop.f32.mrb[0].mxu0
        %809 = vmatprep.mubr.f32.mxu0 0.0
        %810 = vmatmul.mubr.f32.gmra.mrb[0].mxu0 %v642
        %v811 = vpop.f32.mrb[0].mxu0
        %v812 = vadd.f32 %v555, %v811
        %v813 = vpop.f32.mrb[0].mxu0
        %814 = vmatprep.mubr.f32.mxu0 0.0
        %815 = vmatmul.mubr.f32.gmra.mrb[0].mxu0 %v645
        %v816 = vpop.f32.mrb[0].mxu0
        %v817 = vadd.f32 %v560, %v816
        %v818 = vpop.f32.mrb[0].mxu0
        %819 = vmatprep.mubr.f32.mxu0 0.0
        %820 = vmatmul.mubr.f32.gmra.mrb[0].mxu0 %v648
        %v821 = vpop.f32.mrb[0].mxu0
        %v822 = vadd.f32 %v565, %v821
        %v823 = vpop.f32.mrb[0].mxu0
        %824 = vmatprep.mubr.f32.mxu0 0.0
        %825 = vmatmul.mubr.f32.gmra.mrb[0].mxu0 %v651
        %v826 = vpop.f32.mrb[0].mxu0
        %v827 = vadd.f32 %v570, %v826
        %v828 = vpop.f32.mrb[0].mxu0
        %829 = vmatprep.mubr.f32.mxu0 0.0
        %830 = vmatmul.mubr.f32.gmra.mrb[0].mxu0 %v654
        %v831 = vpop.f32.mrb[0].mxu0
        %v832 = vadd.f32 %v575, %v831
        %v833 = vpop.f32.mrb[0].mxu0
        %834 = vmatprep.mubr.f32.mxu0 0.0
        %835 = vmatmul.mubr.f32.gmra.mrb[0].mxu0 %v657
        %v836 = vpop.f32.mrb[0].mxu0
        %v837 = vadd.f32 %v580, %v836
        %v838 = vpop.f32.mrb[0].mxu0
        %839 = vmatprep.mubr.f32.mxu0 0.0
        %840 = vmatmul.mubr.f32.gmra.mrb[0].mxu0 %v660
        %v841 = vpop.f32.mrb[0].mxu0
        %v842 = vadd.f32 %v585, %v841
        %v843 = vpop.f32.mrb[0].mxu0
        %844 = vmatprep.mubr.f32.mxu0 0.0
        %845 = vmatmul.mubr.f32.gmra.mrb[0].mxu0 %v663
        %v846 = vpop.f32.mrb[0].mxu0
        %v847 = vadd.f32 %v590, %v846
        %v848 = vpop.f32.mrb[0].mxu0
        %849 = vdwg.mxu0
        %v850 = vld [vmem:[%s284] sm:$0x1]
        %v851 = vxor.u32 %v772, 2147483648
        %v852 = vxor.u32 %v777, 2147483648
        %v853 = vxor.u32 %v782, 2147483648
        %v854 = vxor.u32 %v787, 2147483648
        %v855 = vmul.f32 %v851, 1.442695
        %v856 = vpow.pop %v855
        %v857 = vmul.f32 %v852, 1.442695
        %v858 = vpow.pop %v857
        %v859 = vmul.f32 %v853, 1.442695
        %v860 = vpow.pop %v859
        %v861 = vmul.f32 %v854, 1.442695
        %v862 = vpow.pop %v861
        %v863 = vadd.f32 %v856, 1.0
        %v864 = vadd.f32 %v858, 1.0
        %v865 = vadd.f32 %v860, 1.0
        %v866 = vadd.f32 %v862, 1.0
        %v867 = vrcp.pop %v863
        %v868 = vmul.f32 1.0, %v867
        %v869 = vrcp.pop %v864
        %v870 = vmul.f32 1.0, %v869
        %v871 = vrcp.pop %v865
        %v872 = vmul.f32 1.0, %v871
        %v873 = vrcp.pop %v866
        %v874 = vmul.f32 1.0, %v873
        %v875 = vmul.f32 %v732, %v868
        %v876 = vmul.f32 %v737, %v870
        %v877 = vmul.f32 %v742, %v872
        %v878 = vmul.f32 %v747, %v874
        %v880 = vlaneseq
        %v881 = vshrl.u32 %v880, 7
        %v882 = vsub.s32 0, %v881
        %v883 = vrot.slane %v850, %v882
        %v885 = vmul.f32 %v875, %v883
        %v886 = vmul.f32 %v876, %v883
        %v887 = vmul.f32 %v877, %v883
        %v888 = vmul.f32 %v878, %v883
        %v889 = vxor.u32 %v792, 2147483648
        %v890 = vxor.u32 %v797, 2147483648
        %v891 = vxor.u32 %v802, 2147483648
        %v892 = vxor.u32 %v807, 2147483648
        %v893 = vmul.f32 %v889, 1.442695
        %v894 = vpow.pop %v893
        %v895 = vmul.f32 %v890, 1.442695
        %v896 = vpow.pop %v895
        %v897 = vmul.f32 %v891, 1.442695
        %v898 = vpow.pop %v897
        %v899 = vmul.f32 %v892, 1.442695
        %v900 = vpow.pop %v899
        %v901 = vadd.f32 %v894, 1.0
        %v902 = vadd.f32 %v896, 1.0
        %v903 = vadd.f32 %v898, 1.0
        %v904 = vadd.f32 %v900, 1.0
        %v905 = vrcp.pop %v901
        %v906 = vmul.f32 1.0, %v905
        %v907 = vrcp.pop %v902
        %v908 = vmul.f32 1.0, %v907
        %v909 = vrcp.pop %v903
        %v910 = vmul.f32 1.0, %v909
        %v911 = vrcp.pop %v904
        %v912 = vmul.f32 1.0, %v911
        %v913 = vmul.f32 %v752, %v906
        %v914 = vmul.f32 %v757, %v908
        %v915 = vmul.f32 %v762, %v910
        %v916 = vmul.f32 %v767, %v912
        %v917 = vmul.f32 %v913, %v883
        %v918 = vmul.f32 %v914, %v883
        %v919 = vmul.f32 %v915, %v883
        %v920 = vmul.f32 %v916, %v883
        %v921 = vxor.u32 %v812, 2147483648
        %v922 = vxor.u32 %v817, 2147483648
        %v923 = vxor.u32 %v822, 2147483648
        %v924 = vxor.u32 %v827, 2147483648
        %v925 = vxor.u32 %v832, 2147483648
        %v926 = vxor.u32 %v837, 2147483648
        %v927 = vxor.u32 %v842, 2147483648
        %v928 = vxor.u32 %v847, 2147483648
        %v929 = vmul.f32 %v921, 1.442695
        %v930 = vpow.pop %v929
        %v931 = vmul.f32 %v922, 1.442695
        %v932 = vpow.pop %v931
        %v933 = vmul.f32 %v923, 1.442695
        %v934 = vpow.pop %v933
        %v935 = vmul.f32 %v924, 1.442695
        %v936 = vpow.pop %v935
        %v937 = vmul.f32 %v925, 1.442695
        %v938 = vpow.pop %v937
        %v939 = vmul.f32 %v926, 1.442695
        %v940 = vpow.pop %v939
        %v941 = vmul.f32 %v927, 1.442695
        %v942 = vpow.pop %v941
        %v943 = vmul.f32 %v928, 1.442695
        %v944 = vpow.pop %v943
        %v945 = vadd.f32 %v930, 1.0
        %v946 = vadd.f32 %v932, 1.0
        %v947 = vadd.f32 %v934, 1.0
        %v948 = vadd.f32 %v936, 1.0
        %v949 = vadd.f32 %v938, 1.0
        %v950 = vadd.f32 %v940, 1.0
        %v951 = vadd.f32 %v942, 1.0
        %v952 = vadd.f32 %v944, 1.0
        %v953 = vrcp.pop %v945
        %v954 = vmul.f32 1.0, %v953
        %v955 = vrcp.pop %v946
        %v956 = vmul.f32 1.0, %v955
        %v957 = vrcp.pop %v947
        %v958 = vmul.f32 1.0, %v957
        %v959 = vrcp.pop %v948
        %v960 = vmul.f32 1.0, %v959
        %v961 = vrcp.pop %v949
        %v962 = vmul.f32 1.0, %v961
        %v963 = vrcp.pop %v950
        %v964 = vmul.f32 1.0, %v963
        %v965 = vrcp.pop %v951
        %v966 = vmul.f32 1.0, %v965
        %v967 = vrcp.pop %v952
        %v968 = vmul.f32 1.0, %v967
        %v969 = vpack.c.bf16 %v886, %v885
        %v970 = vpack.c.bf16 %v888, %v887
        %v973 = vunpack.c.l.b16 %v969
        %v974 = vunpack.c.h.b16 %v969
        %v975 = vunpack.c.l.b16 %v970
        %v976 = vunpack.c.h.b16 %v970
        %v977 = vpack.c.b16 %v973, %v973
        %v978 = vpack.c.b16 %v974, %v974
        %v979 = vpack.c.b16 %v975, %v975
        %v980 = vpack.c.b16 %v976, %v976
        %985 = vst [vmem:[%s317] sm:$0xf] %v977
        %986 = vst [vmem:[%s317 + $0x4] sm:$0xf] %v978
        %987 = vst [vmem:[%s317 + $0x8] sm:$0xf] %v979
        %988 = vst [vmem:[%s317 + $0xc] sm:$0xf] %v980
        %v989 = vpack.c.bf16 %v918, %v917
        %v990 = vpack.c.bf16 %v920, %v919
        %v993 = vunpack.c.l.b16 %v989
        %v994 = vunpack.c.h.b16 %v989
        %v995 = vunpack.c.l.b16 %v990
        %v996 = vunpack.c.h.b16 %v990
        %v997 = vpack.c.b16 %v993, %v993
        %v998 = vpack.c.b16 %v994, %v994
        %v999 = vpack.c.b16 %v995, %v995
        %v1000 = vpack.c.b16 %v996, %v996
        %1005 = vst [vmem:[%s324] sm:$0xf] %v997
        %1006 = vst [vmem:[%s324 + $0x4] sm:$0xf] %v998
        %1007 = vst [vmem:[%s324 + $0x8] sm:$0xf] %v999
        %1008 = vst [vmem:[%s324 + $0xc] sm:$0xf] %v1000
        %1009 = vst [vmem:[%s331] sm:$0xff] %v954
        %1010 = vst [vmem:[%s331 + $0x8] sm:$0xff] %v956
        %1011 = vst [vmem:[%s331 + $0x10] sm:$0xff] %v958
        %1012 = vst [vmem:[%s331 + $0x18] sm:$0xff] %v960
        %1013 = vst [vmem:[%s331 + $0x20] sm:$0xff] %v962
        %1014 = vst [vmem:[%s331 + $0x28] sm:$0xff] %v964
        %1015 = vst [vmem:[%s331 + $0x30] sm:$0xff] %v966
        %1016 = vst [vmem:[%s331 + $0x38] sm:$0xff] %v968
        %s1017 = sand.u32 %s147, 1
        %s1018 = scalar_lea.sflag [#allocation4], %s1017
        %s1019 = sand.u32 %s147, 1
        %s1020 = smul.addr %s1019, 16
        %s1021 = scalar_lea.vmem [#allocation5], %s1020
        %s1022 = sand.u32 %s27, 1
        %s1023 = scalar_lea.sflag [#allocation7], %s1022
        %s1024 = sand.u32 %s175, 1
        %s1025 = smul.addr %s1024, 16
        %s1026 = scalar_lea.vmem [#allocation6], %s1025
        %s1027 = sand.u32 %s27, 1
        %s1028 = scalar_lea.sflag [#allocation7], %s1027
        %s1029 = sand.u32 %s203, 1
        %s1030 = smul.addr %s1029, 64
        %s1031 = scalar_lea.vmem [#allocation8], %s1030
        // Predicated region
        $region41: #{tpu_custom_call.1} parent=35 // pred_check
          %p1032 = pneg %p157
        $region42: #{tpu_custom_call.1} parent=35 // pred_check_branch
          %1034 = sbr.rel (%p1032) target = $region44
        $region43: #{tpu_custom_call.1} parent=35 // pred_region
          %s1036 = ssub.s32 256, 256
          %1037 = vsyncadd %s1018, %s1036
          %s1038 = smul.addr %s31, 8
          %s1039 = sadd.s32 %s32, %s1038
          %s1040 = smul.addr %s1039, 64
          %s1041 = scalar_lea.hbm %s4, %s1040
          %s1042 = sshll.u32 %s1021, 4
          %s1043 = int_to_ptr.vmem [resolvable:$true] %s1042
          %1048 = dma.vmem_to_hbm [thread:$0]  %s1043, 256, %s1041, %s1018, 64, 128, 4
        $region44: #{tpu_custom_call.1} parent=35 // pred_fallthru
          _
        // Predicated region
        $region45: #{tpu_custom_call.1} parent=35 // pred_check
          %p1049 = pneg %p185
        $region46: #{tpu_custom_call.1} parent=35 // pred_check_branch
          %1051 = sbr.rel (%p1049) target = $region48
        $region47: #{tpu_custom_call.1} parent=35 // pred_region
          %s1053 = ssub.s32 256, 256
          %1054 = vsyncadd %s1023, %s1053
          %s1055 = smul.addr %s31, 8
          %s1056 = sadd.s32 %s32, %s1055
          %s1057 = smul.addr %s1056, 64
          %s1058 = scalar_lea.hbm %s5, %s1057
          %s1059 = sshll.u32 %s1026, 4
          %s1060 = int_to_ptr.vmem [resolvable:$true] %s1059
          %1065 = dma.vmem_to_hbm [thread:$0]  %s1060, 256, %s1058, %s1023, 64, 128, 4
        $region48: #{tpu_custom_call.1} parent=35 // pred_fallthru
          _
        // Predicated region
        $region49: #{tpu_custom_call.1} parent=35 // pred_check
          %p1066 = pneg %p213
        $region50: #{tpu_custom_call.1} parent=35 // pred_check_branch
          %1068 = sbr.rel (%p1066) target = $region52
        $region51: #{tpu_custom_call.1} parent=35 // pred_region
          %s1070 = ssub.s32 1024, 1024
          %1071 = vsyncadd %s1028, %s1070
          %s1072 = smul.addr %s31, 16
          %s1073 = sadd.s32 %s32, %s1072
          %s1074 = smul.addr %s1073, 128
          %s1075 = scalar_lea.hbm %s6, %s1074
          %s1076 = sshll.u32 %s1031, 4
          %s1077 = int_to_ptr.vmem [resolvable:$true] %s1076
          %1082 = dma.vmem_to_hbm [thread:$0]  %s1077, 1024, %s1075, %s1028, 128, 256, 8
        $region52: #{tpu_custom_call.1} parent=35 // pred_fallthru
          _
      $region36: #{tpu_custom_call.1} parent=5 // pred_fallthru
        _
      %p1083 = scmp.le.s32.totalorder 2, %s22
      // Predicated region
      $region53: #{tpu_custom_call.1} parent=5 // pred_check
        %p1084 = pneg %p1083
      $region54: #{tpu_custom_call.1} parent=5 // pred_check_branch
        %1086 = sbr.rel (%p1084) target = $region56
      $region55: #{tpu_custom_call.1} parent=5 // pred_region
        %s1087 = ssub.s32 %s22, 2
        // Predicated region
        $region57: #{tpu_custom_call.1} parent=55 // pred_check
          %p1088 = pneg %p163
        $region58: #{tpu_custom_call.1} parent=55 // pred_check_branch
          %1090 = sbr.rel (%p1088) target = $region60
        $region59: #{tpu_custom_call.1} parent=55 // pred_region
          %s1091 = sand.u32 %s148, 1
          %s1092 = scalar_lea.sflag [#allocation4], %s1091
          %s1093 = sand.u32 %s148, 1
          %s1094 = smul.addr %s1093, 16
          %s1095 = scalar_lea.vmem [#allocation5], %s1094
          %1096 = dma.done %s1092, 256
        $region60: #{tpu_custom_call.1} parent=55 // pred_fallthru
          _
        // Predicated region
        $region61: #{tpu_custom_call.1} parent=55 // pred_check
          %p1097 = pneg %p191
        $region62: #{tpu_custom_call.1} parent=55 // pred_check_branch
          %1099 = sbr.rel (%p1097) target = $region64
        $region63: #{tpu_custom_call.1} parent=55 // pred_region
          %s1100 = sand.u32 %s28, 1
          %s1101 = scalar_lea.sflag [#allocation7], %s1100
          %s1102 = sand.u32 %s176, 1
          %s1103 = smul.addr %s1102, 16
          %s1104 = scalar_lea.vmem [#allocation6], %s1103
          %1105 = dma.done %s1101, 256
        $region64: #{tpu_custom_call.1} parent=55 // pred_fallthru
          _
        // Predicated region
        $region65: #{tpu_custom_call.1} parent=55 // pred_check
          %p1106 = pneg %p219
        $region66: #{tpu_custom_call.1} parent=55 // pred_check_branch
          %1108 = sbr.rel (%p1106) target = $region68
        $region67: #{tpu_custom_call.1} parent=55 // pred_region
          %s1109 = sand.u32 %s28, 1
          %s1110 = scalar_lea.sflag [#allocation7], %s1109
          %s1111 = sand.u32 %s204, 1
          %s1112 = smul.addr %s1111, 64
          %s1113 = scalar_lea.vmem [#allocation8], %s1112
          %1114 = dma.done %s1110, 1024
        $region68: #{tpu_custom_call.1} parent=55 // pred_fallthru
          _
      $region56: #{tpu_custom_call.1} parent=5 // pred_fallthru
        _
    $region6: #{tpu_custom_call.1} parent=1 // loop_footer
      %s26 = sadd.s32 1, %s22
    $region7: #{tpu_custom_call.1} parent=1 // loop_footer_branch
      %21 = sbr.rel target = $region3
    $region8: #{tpu_custom_call.1} parent=1 // loop_exit
      _
    %1115 = vsyncpa [#allocation3], 1
    %s1116 = scalar_lea.sflag [#allocation3], 1
    %1117 = vsyncpa %s1116, 1
    %1118 = vsyncpa [#allocation4], 1
    %s1119 = scalar_lea.sflag [#allocation4], 1
    %1120 = vsyncpa %s1119, 1
    %1121 = vsyncpa [#allocation7], 1
    %s1122 = scalar_lea.sflag [#allocation7], 1
    %1123 = vsyncpa %s1122, 1

</llo_original>
